<compile_context>
chip_gen: v7x
topology: tpu7x:2x2x1
jax: 0.10.0
libtpu: 0.0.40
codegen_flags: <defaults>
</compile_context>

<pallas_src>
import jax
import jax.numpy as jnp
from jax.experimental import pallas as pl
from jax.experimental.pallas import tpu as pltpu

IN_FEATURES = 28 * 28   # 784
HIDDEN = 128
OUT_FEATURES = 10
TB_MAX = 2048           # batch-tile cap; multiple of 8, fits scoped VMEM everywhere


def _round_up(n, m):
    return ((n + m - 1) // m) * m


def _pick_tb(batch, tb_max=TB_MAX):
    """Batch tile: multiple of 8, <= tb_max, and >= 2 grid steps whenever the
    batch allows it (so the 'parallel' grid axis can use both v7x TCs)."""
    tb = min(tb_max, _round_up(batch, 8))
    if batch > tb:              # already multiple grid steps
        return tb
    if batch > 8:               # one tile would cover everything -> split in two
        return max(8, _round_up((batch + 1) // 2, 8))
    return tb                   # tiny batch: single (partial) tile


def mlp_kernel(x_ref, w1_ref, b1_ref, w2_ref, b2_ref, o_ref):
    # fc1 on the MXU, f32 operands / f32 accumulation (matches PyTorch math;
    # the kernel is HBM-bound so the extra MXU passes cost nothing).
    h = jnp.dot(x_ref[...], w1_ref[...], preferred_element_type=jnp.float32)
    # bias + ReLU on the VPU (b1 is (1, 128), broadcasts over rows).
    h = jnp.maximum(h + b1_ref[...], 0.0)
    # fc2 on the MXU, narrow 10-wide output written directly (masked vst is
    # cheap here; the vst slot has slack and HBM writeback drops ~13x).
    out = jnp.dot(h, w2_ref[...], preferred_element_type=jnp.float32)
    o_ref[...] = out + b2_ref[...]


@jax.jit
def simple_nn_forward(x, w1, b1, w2, b2):
    """x: [..., 28, 28] (any leading dims) -> logits [B, 10] (float32).

    Mirrors: x.view(-1, 784); relu(x @ W1 + b1) @ W2 + b2.
    """
    x2d = x.reshape(-1, IN_FEATURES).astype(jnp.float32)   # x.view(-1, 784)
    B = x2d.shape[0]
    tb = _pick_tb(B)
    grid = (pl.cdiv(B, tb),)

    w1f = w1.astype(jnp.float32)                            # (784, 128)
    w2f = w2.astype(jnp.float32)                            # (128, 10)
    b1_2d = b1.reshape(1, HIDDEN).astype(jnp.float32)       # (1, 128)
    b2_2d = b2.reshape(1, OUT_FEATURES).astype(jnp.float32) # (1, 10)

    cost = pl.CostEstimate(
        flops=2 * B * IN_FEATURES * HIDDEN + 2 * B * HIDDEN * OUT_FEATURES,
        transcendentals=0,
        bytes_accessed=(B * IN_FEATURES * 4                 # x (f32, read once)
                        + IN_FEATURES * HIDDEN * 4          # W1
                        + HIDDEN * OUT_FEATURES * 4         # W2
                        + (HIDDEN + OUT_FEATURES) * 4       # biases
                        + B * OUT_FEATURES * 4),            # logits (10-wide f32)
    )

    return pl.pallas_call(
        mlp_kernel,
        out_shape=jax.ShapeDtypeStruct((B, OUT_FEATURES), jnp.float32),
        grid_spec=pltpu.PrefetchScalarGridSpec(
            num_scalar_prefetch=0,
            grid=grid,
            in_specs=[
                # x: tiled over batch, double-buffered by the BlockSpec pipeline.
                pl.BlockSpec((tb, IN_FEATURES), lambda i: (i, 0)),
                # Weights / biases: constant index_map -> resident in VMEM.
                pl.BlockSpec((IN_FEATURES, HIDDEN), lambda i: (0, 0)),
                pl.BlockSpec((1, HIDDEN), lambda i: (0, 0)),
                pl.BlockSpec((HIDDEN, OUT_FEATURES), lambda i: (0, 0)),
                pl.BlockSpec((1, OUT_FEATURES), lambda i: (0, 0)),
            ],
            out_specs=pl.BlockSpec((tb, OUT_FEATURES), lambda i: (i, 0)),
        ),
        compiler_params=pltpu.CompilerParams(
            dimension_semantics=("parallel",),
            vmem_limit_bytes=32 * 1024 * 1024,   # covers tb=2048 f32 on v5e too
        ),
        cost_estimate=cost,
    )(x2d, w1f, b1_2d, w2f, b2_2d)


def init_params(key):
    """Deterministic init matching nn.Linear's U(-1/sqrt(fan_in), 1/sqrt(fan_in))."""
    k1, k2, k3, k4 = jax.random.split(key, 4)
    bound1 = 1.0 / (IN_FEATURES ** 0.5)
    bound2 = 1.0 / (HIDDEN ** 0.5)
    w1 = jax.random.uniform(k1, (IN_FEATURES, HIDDEN), jnp.float32,
                            minval=-bound1, maxval=bound1)
    b1 = jax.random.uniform(k2, (HIDDEN,), jnp.float32,
                            minval=-bound1, maxval=bound1)
    w2 = jax.random.uniform(k3, (HIDDEN, OUT_FEATURES), jnp.float32,
                            minval=-bound2, maxval=bound2)
    b2 = jax.random.uniform(k4, (OUT_FEATURES,), jnp.float32,
                            minval=-bound2, maxval=bound2)
    return w1, b1, w2, b2


if __name__ == "__main__":
    key = jax.random.PRNGKey(0)
    kx, kp = jax.random.split(key)

    # Small MNIST-like batch: [B, 1, 28, 28]
    x = jax.random.normal(kx, (2, 1, 28, 28), jnp.float32)
    w1, b1, w2, b2 = init_params(kp)

    out = jax.block_until_ready(simple_nn_forward(x, w1, b1, w2, b2))
    assert out.shape == (2, OUT_FEATURES)
    assert out.dtype == jnp.float32

    # Full-f32 PyTorch-equivalent reference.
    x2d = x.reshape(-1, IN_FEATURES)
    ref = jnp.maximum(x2d @ w1 + b1, 0.0) @ w2 + b2
    assert jnp.allclose(out, ref, atol=2e-2, rtol=2e-2), (
        f"max abs err {jnp.max(jnp.abs(out - ref))}")

    print("KERNEL_OK")
</pallas_src>

<mosaic_0001>
module attributes {stable_mosaic.version = 11 : i64} {
  func.func @mlp_kernel(%arg0: i32, %arg1: memref<8x784xf32, #tpu.memory_space<vmem>>, %arg2: memref<784x128xf32, #tpu.memory_space<vmem>>, %arg3: memref<1x128xf32, #tpu.memory_space<vmem>>, %arg4: memref<128x10xf32, #tpu.memory_space<vmem>>, %arg5: memref<1x10xf32, #tpu.memory_space<vmem>>, %arg6: memref<8x10xf32, #tpu.memory_space<vmem>>) attributes {dimension_semantics = [#tpu.dimension_semantics<parallel>], iteration_bounds = array<i64: 1>, scalar_prefetch = 0 : i64, scratch_operands = 0 : i64, tpu.core_type = #tpu.core_type<tc>, window_params = [{transform_indices = @transform_0, window_bounds = array<i64: 8, 784>}, {pipeline_mode = #tpu.pipeline_mode<synchronous>, transform_indices = @transform_1, window_bounds = array<i64: 784, 128>}, {pipeline_mode = #tpu.pipeline_mode<synchronous>, transform_indices = @transform_2, window_bounds = array<i64: 1, 128>}, {pipeline_mode = #tpu.pipeline_mode<synchronous>, transform_indices = @transform_3, window_bounds = array<i64: 128, 10>}, {pipeline_mode = #tpu.pipeline_mode<synchronous>, transform_indices = @transform_4, window_bounds = array<i64: 1, 10>}, {transform_indices = @transform_5, window_bounds = array<i64: 8, 10>}]} {
    %c0 = arith.constant 0 : index
    %c0_0 = arith.constant 0 : index
    %0 = vector.load %arg1[%c0, %c0_0] : memref<8x784xf32, #tpu.memory_space<vmem>>, vector<8x784xf32>
    %c0_1 = arith.constant 0 : index
    %c0_2 = arith.constant 0 : index
    %1 = vector.load %arg2[%c0_1, %c0_2] : memref<784x128xf32, #tpu.memory_space<vmem>>, vector<784x128xf32>
    %cst = arith.constant dense<0.000000e+00> : vector<8x128xf32>
    %2 = tpu.matmul %0, %1, %cst {dimension_numbers = #tpu.dot_dimension_numbers<[1], [0], [0], [1], [0, 0, 1, 1], [], []>} : vector<8x784xf32>, vector<784x128xf32>, vector<8x128xf32> -> vector<8x128xf32>
    %c0_3 = arith.constant 0 : index
    %c0_4 = arith.constant 0 : index
    %3 = vector.load %arg3[%c0_3, %c0_4] : memref<1x128xf32, #tpu.memory_space<vmem>>, vector<1x128xf32>
    %4 = vector.broadcast %3 : vector<1x128xf32> to vector<8x128xf32>
    %5 = arith.addf %2, %4 : vector<8x128xf32>
    %cst_5 = arith.constant 0.000000e+00 : f32
    %6 = vector.broadcast %cst_5 : f32 to vector<8x128xf32>
    %7 = arith.maximumf %5, %6 : vector<8x128xf32>
    %c0_6 = arith.constant 0 : index
    %c0_7 = arith.constant 0 : index
    %8 = vector.load %arg4[%c0_6, %c0_7] : memref<128x10xf32, #tpu.memory_space<vmem>>, vector<128x10xf32>
    %cst_8 = arith.constant dense<0.000000e+00> : vector<8x10xf32>
    %9 = tpu.matmul %7, %8, %cst_8 {dimension_numbers = #tpu.dot_dimension_numbers<[1], [0], [0], [1], [0, 0, 1, 1], [], []>} : vector<8x128xf32>, vector<128x10xf32>, vector<8x10xf32> -> vector<8x10xf32>
    %c0_9 = arith.constant 0 : index
    %c0_10 = arith.constant 0 : index
    %10 = vector.load %arg5[%c0_9, %c0_10] : memref<1x10xf32, #tpu.memory_space<vmem>>, vector<1x10xf32>
    %11 = vector.broadcast %10 : vector<1x10xf32> to vector<8x10xf32>
    %12 = arith.addf %9, %11 : vector<8x10xf32>
    %c0_11 = arith.constant 0 : index
    %c0_12 = arith.constant 0 : index
    %13 = vector.load %arg6[%c0_11, %c0_12] : memref<8x10xf32, #tpu.memory_space<vmem>>, vector<8x10xf32>
    tpu.vector_store %arg6[%c0_11, %c0_12], %12 {strides = array<i32>} : memref<8x10xf32, #tpu.memory_space<vmem>>, vector<8x10xf32>,
    return
  }
  func.func @transform_0(%arg0: i32) -> (i32, i32) {
    %c0_i32 = arith.constant 0 : i32
    %c0_i32_0 = arith.constant 0 : i32
    return %arg0, %c0_i32 : i32, i32
  }
  func.func @transform_1(%arg0: i32) -> (i32, i32) {
    %c0_i32 = arith.constant 0 : i32
    %c0_i32_0 = arith.constant 0 : i32
    %c0_i32_1 = arith.constant 0 : i32
    return %c0_i32, %c0_i32_0 : i32, i32
  }
  func.func @transform_2(%arg0: i32) -> (i32, i32) {
    %c0_i32 = arith.constant 0 : i32
    %c0_i32_0 = arith.constant 0 : i32
    %c0_i32_1 = arith.constant 0 : i32
    return %c0_i32, %c0_i32_0 : i32, i32
  }
  func.func @transform_3(%arg0: i32) -> (i32, i32) {
    %c0_i32 = arith.constant 0 : i32
    %c0_i32_0 = arith.constant 0 : i32
    %c0_i32_1 = arith.constant 0 : i32
    return %c0_i32, %c0_i32_0 : i32, i32
  }
  func.func @transform_4(%arg0: i32) -> (i32, i32) {
    %c0_i32 = arith.constant 0 : i32
    %c0_i32_0 = arith.constant 0 : i32
    %c0_i32_1 = arith.constant 0 : i32
    return %c0_i32, %c0_i32_0 : i32, i32
  }
  func.func @transform_5(%arg0: i32) -> (i32, i32) {
    %c0_i32 = arith.constant 0 : i32
    %c0_i32_0 = arith.constant 0 : i32
    return %arg0, %c0_i32 : i32, i32
  }
}

</mosaic_0001>

<llo_original>
// kernel: simple_nn_forward.1
$region0: #{simple_nn_forward.1}
  #allocation0 [shape = 'u32[]', space=smem, size = 0x4, offset = 0x4, fixed_abs, tag = 'smem constant byte address 0x4 - core index']
  #allocation1 [shape = 'u32[144,128]{1,0:T(1,128)}', space=vmem, size = 0x12000, scoped, tag = 'internal scratch']
  %s0 = inlined_call_operand.vmem [shape: f32[2,784], index: 0, kind: input, shape index: {}]
  %s1 = inlined_call_operand.hbm [shape: f32[784,128], index: 1, kind: input, shape index: {}]
  %s2 = inlined_call_operand.vmem [shape: f32[1,128], index: 2, kind: input, shape index: {}]
  %s3 = inlined_call_operand.vmem [shape: f32[128,10], index: 3, kind: input, shape index: {}]
  %s4 = inlined_call_operand.vmem [shape: f32[1,10], index: 4, kind: input, shape index: {}]
  %s5 = inlined_call_operand.hbm [shape: f32[2,10], index: 5, kind: output, shape index: {}]
  %s6 = sld [smem:[#allocation0]]
  $region34: #{simple_nn_forward.1} parent=0
    _
  %s8 = ssub.s32 1, %s6
  %s9 = scalar_select 0, %s8, %s6
  $region1: #{simple_nn_forward.1} parent=0
    #allocation2 [shape = 'u8[401408]{0}', space=vmem, size = 0x62000, scoped, tag = 'input window, operand 1, single buffered']
    #allocation3 [shape = 's32[1]{0}', space=sflag, size = 0x4, scoped, tag = 'scoped memory for simple_nn_forward.1']
    #allocation4 [shape = 's32[1]{0}', space=sflag, size = 0x4, scoped, tag = 'scoped memory for simple_nn_forward.1']
    #allocation5 [shape = 'u8[4096]{0}', space=vmem, size = 0x1000, scoped, tag = 'output window, operand 0, single buffered']
    %10 = vsyncpa [#allocation3], 0
    %11 = vsyncpa [#allocation4], 0
    // Predicated region
    $region2: #{simple_nn_forward.1} parent=1 // pred_check
      _
    $region3: #{simple_nn_forward.1} parent=1 // pred_check_branch
      %13 = sbr.rel (0) target = $region5
    $region4: #{simple_nn_forward.1} parent=1 // pred_region
      _
    $region5: #{simple_nn_forward.1} parent=1 // pred_fallthru
      _
    // Predicated region
    $region6: #{simple_nn_forward.1} parent=1 // pred_check
      _
    $region7: #{simple_nn_forward.1} parent=1 // pred_check_branch
      %15 = sbr.rel (0) target = $region9
    $region8: #{simple_nn_forward.1} parent=1 // pred_region
      %s17 = ssub.s32 12544, 12544
      %18 = vsyncadd [#allocation3], %s17
      %s19 = sshll.u32 [#allocation2], 4
      %s20 = int_to_ptr.vmem [resolvable:$true] %s19
      %25 = dma.hbm_to_vmem [thread:$0]  %s1, 12544, %s20, [#allocation3], 128, 128, 8
    $region9: #{simple_nn_forward.1} parent=1 // pred_fallthru
      _
    // Predicated region
    $region10: #{simple_nn_forward.1} parent=1 // pred_check
      _
    $region11: #{simple_nn_forward.1} parent=1 // pred_check_branch
      %27 = sbr.rel (0) target = $region13
    $region12: #{simple_nn_forward.1} parent=1 // pred_region
      _
    $region13: #{simple_nn_forward.1} parent=1 // pred_fallthru
      _
    // Predicated region
    $region14: #{simple_nn_forward.1} parent=1 // pred_check
      _
    $region15: #{simple_nn_forward.1} parent=1 // pred_check_branch
      %29 = sbr.rel (0) target = $region17
    $region16: #{simple_nn_forward.1} parent=1 // pred_region
      _
    $region17: #{simple_nn_forward.1} parent=1 // pred_fallthru
      _
    // Predicated region
    $region18: #{simple_nn_forward.1} parent=1 // pred_check
      _
    $region19: #{simple_nn_forward.1} parent=1 // pred_check_branch
      %31 = sbr.rel (0) target = $region21
    $region20: #{simple_nn_forward.1} parent=1 // pred_region
      _
    $region21: #{simple_nn_forward.1} parent=1 // pred_fallthru
      _
    // Predicated region
    $region22: #{simple_nn_forward.1} parent=1 // pred_check
      _
    $region23: #{simple_nn_forward.1} parent=1 // pred_check_branch
      %33 = sbr.rel (0) target = $region25
    $region24: #{simple_nn_forward.1} parent=1 // pred_region
      %34 = dma.done [#allocation3], 12544
    $region25: #{simple_nn_forward.1} parent=1 // pred_fallthru
      _
    %v35 = vld [vmem:[%s0] sm:$0xff]
    %v36 = vld [vmem:[%s0 + $0x8] sm:$0x3f]
    %v37 = vld [vmem:[%s0 + $0xe] sm:$0xff]
    %v38 = vld [vmem:[%s0 + $0x16] sm:$0x3f]
    %v39 = vld [vmem:[%s0 + $0x1c] sm:$0xff]
    %v40 = vld [vmem:[%s0 + $0x24] sm:$0x3f]
    %v41 = vld [vmem:[%s0 + $0x2a] sm:$0xff]
    %v42 = vld [vmem:[%s0 + $0x32] sm:$0x3f]
    %v43 = vld [vmem:[#allocation2] sm:$0xff]
    %v44 = vld [vmem:[#allocation2 + $0x8] sm:$0xff]
    %v45 = vld [vmem:[#allocation2 + $0x10] sm:$0xff]
    %v46 = vld [vmem:[#allocation2 + $0x18] sm:$0xff]
    %v47 = vld [vmem:[#allocation2 + $0x20] sm:$0xff]
    %v48 = vld [vmem:[#allocation2 + $0x28] sm:$0xff]
    %v49 = vld [vmem:[#allocation2 + $0x30] sm:$0xff]
    %v50 = vld [vmem:[#allocation2 + $0x38] sm:$0xff]
    %v51 = vld [vmem:[#allocation2 + $0x40] sm:$0xff]
    %v52 = vld [vmem:[#allocation2 + $0x48] sm:$0xff]
    %v53 = vld [vmem:[#allocation2 + $0x50] sm:$0xff]
    %v54 = vld [vmem:[#allocation2 + $0x58] sm:$0xff]
    %v55 = vld [vmem:[#allocation2 + $0x60] sm:$0xff]
    %v56 = vld [vmem:[#allocation2 + $0x68] sm:$0xff]
    %v57 = vld [vmem:[#allocation2 + $0x70] sm:$0xff]
    %v58 = vld [vmem:[#allocation2 + $0x78] sm:$0xff]
    %v59 = vld [vmem:[#allocation2 + $0x80] sm:$0xff]
    %v60 = vld [vmem:[#allocation2 + $0x88] sm:$0xff]
    %v61 = vld [vmem:[#allocation2 + $0x90] sm:$0xff]
    %v62 = vld [vmem:[#allocation2 + $0x98] sm:$0xff]
    %v63 = vld [vmem:[#allocation2 + $0xa0] sm:$0xff]
    %v64 = vld [vmem:[#allocation2 + $0xa8] sm:$0xff]
    %v65 = vld [vmem:[#allocation2 + $0xb0] sm:$0xff]
    %v66 = vld [vmem:[#allocation2 + $0xb8] sm:$0xff]
    %v67 = vld [vmem:[#allocation2 + $0xc0] sm:$0xff]
    %v68 = vld [vmem:[#allocation2 + $0xc8] sm:$0xff]
    %v69 = vld [vmem:[#allocation2 + $0xd0] sm:$0xff]
    %v70 = vld [vmem:[#allocation2 + $0xd8] sm:$0xff]
    %v71 = vld [vmem:[#allocation2 + $0xe0] sm:$0xff]
    %v72 = vld [vmem:[#allocation2 + $0xe8] sm:$0xff]
    %v73 = vld [vmem:[#allocation2 + $0xf0] sm:$0xff]
    %v74 = vld [vmem:[#allocation2 + $0xf8] sm:$0xff]
    %v75 = vld [vmem:[#allocation2 + $0x100] sm:$0xff]
    %v76 = vld [vmem:[#allocation2 + $0x108] sm:$0xff]
    %v77 = vld [vmem:[#allocation2 + $0x110] sm:$0xff]
    %v78 = vld [vmem:[#allocation2 + $0x118] sm:$0xff]
    %v79 = vld [vmem:[#allocation2 + $0x120] sm:$0xff]
    %v80 = vld [vmem:[#allocation2 + $0x128] sm:$0xff]
    %v81 = vld [vmem:[#allocation2 + $0x130] sm:$0xff]
    %v82 = vld [vmem:[#allocation2 + $0x138] sm:$0xff]
    %v83 = vld [vmem:[#allocation2 + $0x140] sm:$0xff]
    %v84 = vld [vmem:[#allocation2 + $0x148] sm:$0xff]
    %v85 = vld [vmem:[#allocation2 + $0x150] sm:$0xff]
    %v86 = vld [vmem:[#allocation2 + $0x158] sm:$0xff]
    %v87 = vld [vmem:[#allocation2 + $0x160] sm:$0xff]
    %v88 = vld [vmem:[#allocation2 + $0x168] sm:$0xff]
    %v89 = vld [vmem:[#allocation2 + $0x170] sm:$0xff]
    %v90 = vld [vmem:[#allocation2 + $0x178] sm:$0xff]
    %v91 = vld [vmem:[#allocation2 + $0x180] sm:$0xff]
    %v92 = vld [vmem:[#allocation2 + $0x188] sm:$0xff]
    %v93 = vld [vmem:[#allocation2 + $0x190] sm:$0xff]
    %v94 = vld [vmem:[#allocation2 + $0x198] sm:$0xff]
    %v95 = vld [vmem:[#allocation2 + $0x1a0] sm:$0xff]
    %v96 = vld [vmem:[#allocation2 + $0x1a8] sm:$0xff]
    %v97 = vld [vmem:[#allocation2 + $0x1b0] sm:$0xff]
    %v98 = vld [vmem:[#allocation2 + $0x1b8] sm:$0xff]
    %v99 = vld [vmem:[#allocation2 + $0x1c0] sm:$0xff]
    %v100 = vld [vmem:[#allocation2 + $0x1c8] sm:$0xff]
    %v101 = vld [vmem:[#allocation2 + $0x1d0] sm:$0xff]
    %v102 = vld [vmem:[#allocation2 + $0x1d8] sm:$0xff]
    %v103 = vld [vmem:[#allocation2 + $0x1e0] sm:$0xff]
    %v104 = vld [vmem:[#allocation2 + $0x1e8] sm:$0xff]
    %v105 = vld [vmem:[#allocation2 + $0x1f0] sm:$0xff]
    %v106 = vld [vmem:[#allocation2 + $0x1f8] sm:$0xff]
    %v107 = vld [vmem:[#allocation2 + $0x200] sm:$0xff]
    %v108 = vld [vmem:[#allocation2 + $0x208] sm:$0xff]
    %v109 = vld [vmem:[#allocation2 + $0x210] sm:$0xff]
    %v110 = vld [vmem:[#allocation2 + $0x218] sm:$0xff]
    %v111 = vld [vmem:[#allocation2 + $0x220] sm:$0xff]
    %v112 = vld [vmem:[#allocation2 + $0x228] sm:$0xff]
    %v113 = vld [vmem:[#allocation2 + $0x230] sm:$0xff]
    %v114 = vld [vmem:[#allocation2 + $0x238] sm:$0xff]
    %v115 = vld [vmem:[#allocation2 + $0x240] sm:$0xff]
    %v116 = vld [vmem:[#allocation2 + $0x248] sm:$0xff]
    %v117 = vld [vmem:[#allocation2 + $0x250] sm:$0xff]
    %v118 = vld [vmem:[#allocation2 + $0x258] sm:$0xff]
    %v119 = vld [vmem:[#allocation2 + $0x260] sm:$0xff]
    %v120 = vld [vmem:[#allocation2 + $0x268] sm:$0xff]
    %v121 = vld [vmem:[#allocation2 + $0x270] sm:$0xff]
    %v122 = vld [vmem:[#allocation2 + $0x278] sm:$0xff]
    %v123 = vld [vmem:[#allocation2 + $0x280] sm:$0xff]
    %v124 = vld [vmem:[#allocation2 + $0x288] sm:$0xff]
    %v125 = vld [vmem:[#allocation2 + $0x290] sm:$0xff]
    %v126 = vld [vmem:[#allocation2 + $0x298] sm:$0xff]
    %v127 = vld [vmem:[#allocation2 + $0x2a0] sm:$0xff]
    %v128 = vld [vmem:[#allocation2 + $0x2a8] sm:$0xff]
    %v129 = vld [vmem:[#allocation2 + $0x2b0] sm:$0xff]
    %v130 = vld [vmem:[#allocation2 + $0x2b8] sm:$0xff]
    %v131 = vld [vmem:[#allocation2 + $0x2c0] sm:$0xff]
    %v132 = vld [vmem:[#allocation2 + $0x2c8] sm:$0xff]
    %v133 = vld [vmem:[#allocation2 + $0x2d0] sm:$0xff]
    %v134 = vld [vmem:[#allocation2 + $0x2d8] sm:$0xff]
    %v135 = vld [vmem:[#allocation2 + $0x2e0] sm:$0xff]
    %v136 = vld [vmem:[#allocation2 + $0x2e8] sm:$0xff]
    %v137 = vld [vmem:[#allocation2 + $0x2f0] sm:$0xff]
    %v138 = vld [vmem:[#allocation2 + $0x2f8] sm:$0xff]
    %v139 = vld [vmem:[#allocation2 + $0x300] sm:$0xff]
    %v140 = vld [vmem:[#allocation2 + $0x308] sm:$0xff]
    %v141 = vld [vmem:[%s2] sm:$0x1]
    %v143 = vlaneseq
    %v144 = vshrl.u32 %v143, 7
    %v145 = vsub.s32 0, %v144
    %v146 = vrot.slane %v141, %v145
    %v156 = vcombine.low %v35, %v37
    %v157 = vcombine.high %v35, %v37
    %v158 = vcombine.low %v39, %v41
    %v159 = vcombine.high %v39, %v41
    %v161 = vunpack.c.l.s4 1983009808
    %v162 = vunpack.c.0.s8 %v161
    %v163 = vlaneseq
    %v164 = vshrl.u32 %v163, 7
    %v165 = vsub.s32 %v162, %v164
    %v166 = vrot.slane %v156, %v165
    %v168 = vunpack.c.l.s4 1983009808
    %v169 = vunpack.c.0.s8 %v168
    %v170 = vlaneseq
    %v171 = vshrl.u32 %v170, 7
    %v172 = vsub.s32 %v169, %v171
    %v173 = vrot.slane %v157, %v172
    %v175 = vunpack.c.l.s4 1983009808
    %v176 = vunpack.c.0.s8 %v175
    %v177 = vlaneseq
    %v178 = vshrl.u32 %v177, 7
    %v179 = vsub.s32 %v176, %v178
    %v180 = vrot.slane %v158, %v179
    %v182 = vunpack.c.l.s4 1983009808
    %v183 = vunpack.c.0.s8 %v182
    %v184 = vlaneseq
    %v185 = vshrl.u32 %v184, 7
    %v186 = vsub.s32 %v183, %v185
    %v187 = vrot.slane %v159, %v186
    %v188 = vcombine.low %v166, %v180
    %v189 = vcombine.high %v166, %v180
    %v190 = vcombine.low %v173, %v187
    %v191 = vcombine.high %v173, %v187
    %v192 = vcombine.low %v36, %v38
    %v193 = vcombine.high %v36, %v38
    %v194 = vcombine.low %v40, %v42
    %v195 = vcombine.high %v40, %v42
    %v197 = vunpack.c.l.s4 1983009808
    %v198 = vunpack.c.0.s8 %v197
    %v199 = vlaneseq
    %v200 = vshrl.u32 %v199, 7
    %v201 = vsub.s32 %v198, %v200
    %v202 = vrot.slane %v192, %v201
    %v204 = vunpack.c.l.s4 1983009808
    %v205 = vunpack.c.0.s8 %v204
    %v206 = vlaneseq
    %v207 = vshrl.u32 %v206, 7
    %v208 = vsub.s32 %v205, %v207
    %v209 = vrot.slane %v193, %v208
    %v211 = vunpack.c.l.s4 1983009808
    %v212 = vunpack.c.0.s8 %v211
    %v213 = vlaneseq
    %v214 = vshrl.u32 %v213, 7
    %v215 = vsub.s32 %v212, %v214
    %v216 = vrot.slane %v194, %v215
    %v218 = vunpack.c.l.s4 1983009808
    %v219 = vunpack.c.0.s8 %v218
    %v220 = vlaneseq
    %v221 = vshrl.u32 %v220, 7
    %v222 = vsub.s32 %v219, %v221
    %v223 = vrot.slane %v195, %v222
    %v224 = vcombine.low %v202, %v216
    %v225 = vcombine.high %v202, %v216
    %v226 = vcombine.low %v209, %v223
    %vm233 = vcmask 130048
    %v234 = vsel %vm233, %v226, 0
    %236 = vmatprep.subr.mxu0 0.0
    %237 = vmatpush1.msra.mxu0 %v43
    %238 = vmatprep.subr.mxu0 0.0
    %239 = vmatpush1.msra.mxu0 %v44
    %240 = vmatprep.subr.mxu0 0.0
    %241 = vmatpush1.msra.mxu0 %v45
    %242 = vmatprep.subr.mxu0 0.0
    %243 = vmatpush1.msra.mxu0 %v46
    %244 = vmatprep.subr.mxu0 0.0
    %245 = vmatpush1.msra.mxu0 %v47
    %246 = vmatprep.subr.mxu0 0.0
    %247 = vmatpush1.msra.mxu0 %v48
    %248 = vmatprep.subr.mxu0 0.0
    %249 = vmatpush1.msra.mxu0 %v49
    %250 = vmatprep.subr.mxu0 0.0
    %251 = vmatpush1.msra.mxu0 %v50
    %252 = vmatprep.subr.mxu0 0.0
    %253 = vmatpush1.msra.mxu0 %v51
    %254 = vmatprep.subr.mxu0 0.0
    %255 = vmatpush1.msra.mxu0 %v52
    %256 = vmatprep.subr.mxu0 0.0
    %257 = vmatpush1.msra.mxu0 %v53
    %258 = vmatprep.subr.mxu0 0.0
    %259 = vmatpush1.msra.mxu0 %v54
    %260 = vmatprep.subr.mxu0 0.0
    %261 = vmatpush1.msra.mxu0 %v55
    %262 = vmatprep.subr.mxu0 0.0
    %263 = vmatpush1.msra.mxu0 %v56
    %264 = vmatprep.subr.mxu0 0.0
    %265 = vmatpush1.msra.mxu0 %v57
    %266 = vmatprep.subr.mxu0 0.0
    %267 = vmatpush1.msra.mxu0 %v58
    %268 = vmatprep.subr.mxu0 0.0
    %269 = vmatpush1.msra.mxu0 %v59
    %270 = vmatprep.subr.mxu0 0.0
    %271 = vmatpush1.msra.mxu0 %v60
    %272 = vmatprep.subr.mxu0 0.0
    %273 = vmatpush1.msra.mxu0 %v61
    %274 = vmatprep.subr.mxu0 0.0
    %275 = vmatpush1.msra.mxu0 %v62
    %276 = vmatprep.subr.mxu0 0.0
    %277 = vmatpush1.msra.mxu0 %v63
    %278 = vmatprep.subr.mxu0 0.0
    %279 = vmatpush1.msra.mxu0 %v64
    %280 = vmatprep.subr.mxu0 0.0
    %281 = vmatpush1.msra.mxu0 %v65
    %282 = vmatprep.subr.mxu0 0.0
    %283 = vmatpush1.msra.mxu0 %v66
    %284 = vmatprep.subr.mxu0 0.0
    %285 = vmatpush1.msra.mxu0 %v67
    %286 = vmatprep.subr.mxu0 0.0
    %287 = vmatpush1.msra.mxu0 %v68
    %288 = vmatprep.subr.mxu0 0.0
    %289 = vmatpush1.msra.mxu0 %v69
    %290 = vmatprep.subr.mxu0 0.0
    %291 = vmatpush1.msra.mxu0 %v70
    %292 = vmatprep.subr.mxu0 0.0
    %293 = vmatpush1.msra.mxu0 %v71
    %294 = vmatprep.subr.mxu0 0.0
    %295 = vmatpush1.msra.mxu0 %v72
    %296 = vmatprep.subr.mxu0 0.0
    %297 = vmatpush1.msra.mxu0 %v73
    %298 = vmatprep.subr.mxu0 0.0
    %299 = vmatpush1.msra.mxu0 %v74
    %300 = vmatprep.mubr.f32.mxu0 %v189
    %301 = vmatmul.mubr.f32.gmra.mrb[0].mxu0 %v188
    %v302 = vpop.f32.mrb[0].mxu0
    %v303 = vadd.f32 %v146, %v302
    %v304 = vpop.f32.mrb[0].mxu0
    %305 = vdwg.mxu0
    %306 = vmatprep.subr.mxu0 0.0
    %307 = vmatpush1.msra.mxu0 %v75
    %308 = vmatprep.subr.mxu0 0.0
    %309 = vmatpush1.msra.mxu0 %v76
    %310 = vmatprep.subr.mxu0 0.0
    %311 = vmatpush1.msra.mxu0 %v77
    %312 = vmatprep.subr.mxu0 0.0
    %313 = vmatpush1.msra.mxu0 %v78
    %314 = vmatprep.subr.mxu0 0.0
    %315 = vmatpush1.msra.mxu0 %v79
    %316 = vmatprep.subr.mxu0 0.0
    %317 = vmatpush1.msra.mxu0 %v80
    %318 = vmatprep.subr.mxu0 0.0
    %319 = vmatpush1.msra.mxu0 %v81
    %320 = vmatprep.subr.mxu0 0.0
    %321 = vmatpush1.msra.mxu0 %v82
    %322 = vmatprep.subr.mxu0 0.0
    %323 = vmatpush1.msra.mxu0 %v83
    %324 = vmatprep.subr.mxu0 0.0
    %325 = vmatpush1.msra.mxu0 %v84
    %326 = vmatprep.subr.mxu0 0.0
    %327 = vmatpush1.msra.mxu0 %v85
    %328 = vmatprep.subr.mxu0 0.0
    %329 = vmatpush1.msra.mxu0 %v86
    %330 = vmatprep.subr.mxu0 0.0
    %331 = vmatpush1.msra.mxu0 %v87
    %332 = vmatprep.subr.mxu0 0.0
    %333 = vmatpush1.msra.mxu0 %v88
    %334 = vmatprep.subr.mxu0 0.0
    %335 = vmatpush1.msra.mxu0 %v89
    %336 = vmatprep.subr.mxu0 0.0
    %337 = vmatpush1.msra.mxu0 %v90
    %338 = vmatprep.subr.mxu0 0.0
    %339 = vmatpush1.msra.mxu0 %v91
    %340 = vmatprep.subr.mxu0 0.0
    %341 = vmatpush1.msra.mxu0 %v92
    %342 = vmatprep.subr.mxu0 0.0
    %343 = vmatpush1.msra.mxu0 %v93
    %344 = vmatprep.subr.mxu0 0.0
    %345 = vmatpush1.msra.mxu0 %v94
    %346 = vmatprep.subr.mxu0 0.0
    %347 = vmatpush1.msra.mxu0 %v95
    %348 = vmatprep.subr.mxu0 0.0
    %349 = vmatpush1.msra.mxu0 %v96
    %350 = vmatprep.subr.mxu0 0.0
    %351 = vmatpush1.msra.mxu0 %v97
    %352 = vmatprep.subr.mxu0 0.0
    %353 = vmatpush1.msra.mxu0 %v98
    %354 = vmatprep.subr.mxu0 0.0
    %355 = vmatpush1.msra.mxu0 %v99
    %356 = vmatprep.subr.mxu0 0.0
    %357 = vmatpush1.msra.mxu0 %v100
    %358 = vmatprep.subr.mxu0 0.0
    %359 = vmatpush1.msra.mxu0 %v101
    %360 = vmatprep.subr.mxu0 0.0
    %361 = vmatpush1.msra.mxu0 %v102
    %362 = vmatprep.subr.mxu0 0.0
    %363 = vmatpush1.msra.mxu0 %v103
    %364 = vmatprep.subr.mxu0 0.0
    %365 = vmatpush1.msra.mxu0 %v104
    %366 = vmatprep.subr.mxu0 0.0
    %367 = vmatpush1.msra.mxu0 %v105
    %368 = vmatprep.subr.mxu0 0.0
    %369 = vmatpush1.msra.mxu0 %v106
    %370 = vmatprep.mubr.f32.mxu0 %v191
    %371 = vmatmul.mubr.f32.gmra.mrb[0].mxu0 %v190
    %v372 = vpop.f32.mrb[0].mxu0
    %v373 = vadd.f32 %v303, %v372
    %v374 = vpop.f32.mrb[0].mxu0
    %375 = vdwg.mxu0
    %376 = vmatprep.subr.mxu0 0.0
    %377 = vmatpush1.msra.mxu0 %v107
    %378 = vmatprep.subr.mxu0 0.0
    %379 = vmatpush1.msra.mxu0 %v108
    %380 = vmatprep.subr.mxu0 0.0
    %381 = vmatpush1.msra.mxu0 %v109
    %382 = vmatprep.subr.mxu0 0.0
    %383 = vmatpush1.msra.mxu0 %v110
    %384 = vmatprep.subr.mxu0 0.0
    %385 = vmatpush1.msra.mxu0 %v111
    %386 = vmatprep.subr.mxu0 0.0
    %387 = vmatpush1.msra.mxu0 %v112
    %388 = vmatprep.subr.mxu0 0.0
    %389 = vmatpush1.msra.mxu0 %v113
    %390 = vmatprep.subr.mxu0 0.0
    %391 = vmatpush1.msra.mxu0 %v114
    %392 = vmatprep.subr.mxu0 0.0
    %393 = vmatpush1.msra.mxu0 %v115
    %394 = vmatprep.subr.mxu0 0.0
    %395 = vmatpush1.msra.mxu0 %v116
    %396 = vmatprep.subr.mxu0 0.0
    %397 = vmatpush1.msra.mxu0 %v117
    %398 = vmatprep.subr.mxu0 0.0
    %399 = vmatpush1.msra.mxu0 %v118
    %400 = vmatprep.subr.mxu0 0.0
    %401 = vmatpush1.msra.mxu0 %v119
    %402 = vmatprep.subr.mxu0 0.0
    %403 = vmatpush1.msra.mxu0 %v120
    %404 = vmatprep.subr.mxu0 0.0
    %405 = vmatpush1.msra.mxu0 %v121
    %406 = vmatprep.subr.mxu0 0.0
    %407 = vmatpush1.msra.mxu0 %v122
    %408 = vmatprep.subr.mxu0 0.0
    %409 = vmatpush1.msra.mxu0 %v123
    %410 = vmatprep.subr.mxu0 0.0
    %411 = vmatpush1.msra.mxu0 %v124
    %412 = vmatprep.subr.mxu0 0.0
    %413 = vmatpush1.msra.mxu0 %v125
    %414 = vmatprep.subr.mxu0 0.0
    %415 = vmatpush1.msra.mxu0 %v126
    %416 = vmatprep.subr.mxu0 0.0
    %417 = vmatpush1.msra.mxu0 %v127
    %418 = vmatprep.subr.mxu0 0.0
    %419 = vmatpush1.msra.mxu0 %v128
    %420 = vmatprep.subr.mxu0 0.0
    %421 = vmatpush1.msra.mxu0 %v129
    %422 = vmatprep.subr.mxu0 0.0
    %423 = vmatpush1.msra.mxu0 %v130
    %424 = vmatprep.subr.mxu0 0.0
    %425 = vmatpush1.msra.mxu0 %v131
    %426 = vmatprep.subr.mxu0 0.0
    %427 = vmatpush1.msra.mxu0 %v132
    %428 = vmatprep.subr.mxu0 0.0
    %429 = vmatpush1.msra.mxu0 %v133
    %430 = vmatprep.subr.mxu0 0.0
    %431 = vmatpush1.msra.mxu0 %v134
    %432 = vmatprep.subr.mxu0 0.0
    %433 = vmatpush1.msra.mxu0 %v135
    %434 = vmatprep.subr.mxu0 0.0
    %435 = vmatpush1.msra.mxu0 %v136
    %436 = vmatprep.subr.mxu0 0.0
    %437 = vmatpush1.msra.mxu0 %v137
    %438 = vmatprep.subr.mxu0 0.0
    %439 = vmatpush1.msra.mxu0 %v138
    %440 = vmatprep.mubr.f32.mxu0 %v225
    %441 = vmatmul.mubr.f32.gmra.mrb[0].mxu0 %v224
    %v442 = vpop.f32.mrb[0].mxu0
    %v443 = vadd.f32 %v373, %v442
    %v444 = vpop.f32.mrb[0].mxu0
    %445 = vdwg.mxu0
    %446 = vmatprep.subr.mxu0 0.0
    %447 = vmatpush1.msra.mxu0 %v139
    %448 = vmatprep.subr.mxu0 0.0
    %449 = vmatpush1.msra.mxu0 %v140
    %450 = vmatprep.subr.mxu0 0.0
    %451 = vmatpush1.msra.mxu0 0.0
    %452 = vmatprep.subr.mxu0 0.0
    %453 = vmatpush1.msra.mxu0 0.0
    %454 = vmatprep.subr.mxu0 0.0
    %455 = vmatpush1.msra.mxu0 0.0
    %456 = vmatprep.subr.mxu0 0.0
    %457 = vmatpush1.msra.mxu0 0.0
    %458 = vmatprep.subr.mxu0 0.0
    %459 = vmatpush1.msra.mxu0 0.0
    %460 = vmatprep.subr.mxu0 0.0
    %461 = vmatpush1.msra.mxu0 0.0
    %462 = vmatprep.subr.mxu0 0.0
    %463 = vmatpush1.msra.mxu0 0.0
    %464 = vmatprep.subr.mxu0 0.0
    %465 = vmatpush1.msra.mxu0 0.0
    %466 = vmatprep.subr.mxu0 0.0
    %467 = vmatpush1.msra.mxu0 0.0
    %468 = vmatprep.subr.mxu0 0.0
    %469 = vmatpush1.msra.mxu0 0.0
    %470 = vmatprep.subr.mxu0 0.0
    %471 = vmatpush1.msra.mxu0 0.0
    %472 = vmatprep.subr.mxu0 0.0
    %473 = vmatpush1.msra.mxu0 0.0
    %474 = vmatprep.subr.mxu0 0.0
    %475 = vmatpush1.msra.mxu0 0.0
    %476 = vmatprep.subr.mxu0 0.0
    %477 = vmatpush1.msra.mxu0 0.0
    %478 = vmatprep.subr.mxu0 0.0
    %479 = vmatpush1.msra.mxu0 0.0
    %480 = vmatprep.subr.mxu0 0.0
    %481 = vmatpush1.msra.mxu0 0.0
    %482 = vmatprep.subr.mxu0 0.0
    %483 = vmatpush1.msra.mxu0 0.0
    %484 = vmatprep.subr.mxu0 0.0
    %485 = vmatpush1.msra.mxu0 0.0
    %486 = vmatprep.subr.mxu0 0.0
    %487 = vmatpush1.msra.mxu0 0.0
    %488 = vmatprep.subr.mxu0 0.0
    %489 = vmatpush1.msra.mxu0 0.0
    %490 = vmatprep.subr.mxu0 0.0
    %491 = vmatpush1.msra.mxu0 0.0
    %492 = vmatprep.subr.mxu0 0.0
    %493 = vmatpush1.msra.mxu0 0.0
    %494 = vmatprep.subr.mxu0 0.0
    %495 = vmatpush1.msra.mxu0 0.0
    %496 = vmatprep.subr.mxu0 0.0
    %497 = vmatpush1.msra.mxu0 0.0
    %498 = vmatprep.subr.mxu0 0.0
    %499 = vmatpush1.msra.mxu0 0.0
    %500 = vmatprep.subr.mxu0 0.0
    %501 = vmatpush1.msra.mxu0 0.0
    %502 = vmatprep.subr.mxu0 0.0
    %503 = vmatpush1.msra.mxu0 0.0
    %504 = vmatprep.subr.mxu0 0.0
    %505 = vmatpush1.msra.mxu0 0.0
    %506 = vmatprep.subr.mxu0 0.0
    %507 = vmatpush1.msra.mxu0 0.0
    %508 = vmatprep.subr.mxu0 0.0
    %509 = vmatpush1.msra.mxu0 0.0
    %510 = vmatprep.mubr.f32.mxu0 0.0
    %511 = vmatmul.mubr.f32.gmra.mrb[0].mxu0 %v234
    %v512 = vpop.f32.mrb[0].mxu0
    %v513 = vadd.f32 %v443, %v512
    %v514 = vpop.f32.mrb[0].mxu0
    %515 = vdwg.mxu0
    %v516 = vmax.f32 %v513, 0.0
    %v517 = vld [vmem:[%s3] sm:$0xff]
    %v518 = vld [vmem:[%s3 + $0x8] sm:$0xff]
    %v519 = vld [vmem:[%s3 + $0x10] sm:$0xff]
    %v520 = vld [vmem:[%s3 + $0x18] sm:$0xff]
    %v521 = vld [vmem:[%s3 + $0x20] sm:$0xff]
    %v522 = vld [vmem:[%s3 + $0x28] sm:$0xff]
    %v523 = vld [vmem:[%s3 + $0x30] sm:$0xff]
    %v524 = vld [vmem:[%s3 + $0x38] sm:$0xff]
    %v525 = vld [vmem:[%s3 + $0x40] sm:$0xff]
    %v526 = vld [vmem:[%s3 + $0x48] sm:$0xff]
    %v527 = vld [vmem:[%s3 + $0x50] sm:$0xff]
    %v528 = vld [vmem:[%s3 + $0x58] sm:$0xff]
    %v529 = vld [vmem:[%s3 + $0x60] sm:$0xff]
    %v530 = vld [vmem:[%s3 + $0x68] sm:$0xff]
    %v531 = vld [vmem:[%s3 + $0x70] sm:$0xff]
    %v532 = vld [vmem:[%s3 + $0x78] sm:$0xff]
    %v533 = vld [vmem:[%s4] sm:$0x1]
    %v535 = vlaneseq
    %v536 = vshrl.u32 %v535, 7
    %v537 = vsub.s32 0, %v536
    %v538 = vrot.slane %v533, %v537
    %540 = vmatprep.subr.mxu0 0.0
    %541 = vmatpush1.msra.mxu0 %v517
    %542 = vmatprep.subr.mxu0 0.0
    %543 = vmatpush1.msra.mxu0 %v518
    %544 = vmatprep.subr.mxu0 0.0
    %545 = vmatpush1.msra.mxu0 %v519
    %546 = vmatprep.subr.mxu0 0.0
    %547 = vmatpush1.msra.mxu0 %v520
    %548 = vmatprep.subr.mxu0 0.0
    %549 = vmatpush1.msra.mxu0 %v521
    %550 = vmatprep.subr.mxu0 0.0
    %551 = vmatpush1.msra.mxu0 %v522
    %552 = vmatprep.subr.mxu0 0.0
    %553 = vmatpush1.msra.mxu0 %v523
    %554 = vmatprep.subr.mxu0 0.0
    %555 = vmatpush1.msra.mxu0 %v524
    %556 = vmatprep.subr.mxu0 0.0
    %557 = vmatpush1.msra.mxu0 %v525
    %558 = vmatprep.subr.mxu0 0.0
    %559 = vmatpush1.msra.mxu0 %v526
    %560 = vmatprep.subr.mxu0 0.0
    %561 = vmatpush1.msra.mxu0 %v527
    %562 = vmatprep.subr.mxu0 0.0
    %563 = vmatpush1.msra.mxu0 %v528
    %564 = vmatprep.subr.mxu0 0.0
    %565 = vmatpush1.msra.mxu0 %v529
    %566 = vmatprep.subr.mxu0 0.0
    %567 = vmatpush1.msra.mxu0 %v530
    %568 = vmatprep.subr.mxu0 0.0
    %569 = vmatpush1.msra.mxu0 %v531
    %570 = vmatprep.subr.mxu0 0.0
    %571 = vmatpush1.msra.mxu0 %v532
    %572 = vmatprep.subr.mxu0 0.0
    %573 = vmatpush1.msra.mxu0 0.0
    %574 = vmatprep.subr.mxu0 0.0
    %575 = vmatpush1.msra.mxu0 0.0
    %576 = vmatprep.subr.mxu0 0.0
    %577 = vmatpush1.msra.mxu0 0.0
    %578 = vmatprep.subr.mxu0 0.0
    %579 = vmatpush1.msra.mxu0 0.0
    %580 = vmatprep.subr.mxu0 0.0
    %581 = vmatpush1.msra.mxu0 0.0
    %582 = vmatprep.subr.mxu0 0.0
    %583 = vmatpush1.msra.mxu0 0.0
    %584 = vmatprep.subr.mxu0 0.0
    %585 = vmatpush1.msra.mxu0 0.0
    %586 = vmatprep.subr.mxu0 0.0
    %587 = vmatpush1.msra.mxu0 0.0
    %588 = vmatprep.subr.mxu0 0.0
    %589 = vmatpush1.msra.mxu0 0.0
    %590 = vmatprep.subr.mxu0 0.0
    %591 = vmatpush1.msra.mxu0 0.0
    %592 = vmatprep.subr.mxu0 0.0
    %593 = vmatpush1.msra.mxu0 0.0
    %594 = vmatprep.subr.mxu0 0.0
    %595 = vmatpush1.msra.mxu0 0.0
    %596 = vmatprep.subr.mxu0 0.0
    %597 = vmatpush1.msra.mxu0 0.0
    %598 = vmatprep.subr.mxu0 0.0
    %599 = vmatpush1.msra.mxu0 0.0
    %600 = vmatprep.subr.mxu0 0.0
    %601 = vmatpush1.msra.mxu0 0.0
    %602 = vmatprep.subr.mxu0 0.0
    %603 = vmatpush1.msra.mxu0 0.0
    %604 = vmatprep.mubr.f32.mxu0 0.0
    %605 = vmatmul.mubr.f32.gmra.mrb[0].mxu0 %v516
    %v606 = vpop.f32.mrb[0].mxu0
    %v607 = vadd.f32 %v538, %v606
    %v608 = vpop.f32.mrb[0].mxu0
    %609 = vdwg.mxu0
    %vm610 = vcmask 80896
    %611 = vst.msk [vmem:[#allocation5] sm:$0xff] %vm610, %v607
    // Predicated region
    $region26: #{simple_nn_forward.1} parent=1 // pred_check
      _
    $region27: #{simple_nn_forward.1} parent=1 // pred_check_branch
      %613 = sbr.rel (0) target = $region29
    $region28: #{simple_nn_forward.1} parent=1 // pred_region
      %s615 = ssub.s32 128, 32
      %616 = vsyncadd [#allocation4], %s615
      %s617 = sshll.u32 [#allocation5], 4
      %s618 = int_to_ptr.vmem [resolvable:$true] %s617
      %623 = dma.vmem_to_hbm [thread:$0]  %s618, 32, %s5, [#allocation4], 32, 32, 2
    $region29: #{simple_nn_forward.1} parent=1 // pred_fallthru
      _
    // Predicated region
    $region30: #{simple_nn_forward.1} parent=1 // pred_check
      _
    $region31: #{simple_nn_forward.1} parent=1 // pred_check_branch
      %625 = sbr.rel (0) target = $region33
    $region32: #{simple_nn_forward.1} parent=1 // pred_region
      %626 = dma.done [#allocation4], 128
    $region33: #{simple_nn_forward.1} parent=1 // pred_fallthru
      _
    %627 = vsyncpa [#allocation3], 1
    %628 = vsyncpa [#allocation4], 1

</llo_original>
